<compile_context>
chip_gen: v5e
topology: v5e:2x2
jax: 0.10.0
libtpu: 0.0.40
codegen_flags: <defaults>
</compile_context>

<pallas_src>
import jax
import jax.numpy as jnp
from jax.experimental import pallas as pl
from jax.experimental.pallas import tpu as pltpu


# ----------------------------------------------------------------------------
# Faithful forward: identity. No kernel, no HBM traffic.
# ----------------------------------------------------------------------------
def identity_map(x: jax.Array, *args, **kwargs) -> jax.Array:
    """Pallas/JAX implementation of IdentityMap.forward: returns x unchanged."""
    return x


# IdentityMap has a `config` property in PyTorch; expose equivalently.
IDENTITY_MAP_CONFIG = {"mm_projector_type": "identity"}


# ----------------------------------------------------------------------------
# Optional materializing copy (only if a fresh buffer is explicitly required).
# ----------------------------------------------------------------------------
_LANES = 128                          # lane-dense last dim -> unmasked vst
_TARGET_TILE_BYTES = 4 * 1024 * 1024  # ~4 MiB/tile: 4 bufs = 16 MiB live (v7x-safe)
_SMALL_BYTES = 64 * 1024              # below this, kernel launch overhead dominates
_VMEM_LIMIT_BYTES = 32 * 1024 * 1024  # raise v5e's 16 MiB scoped default


def _copy_kernel(x_ref, o_ref):
    # Full-tile copy of the current block.
    o_ref[...] = x_ref[...]


def _sublane_multiple(itemsize: int) -> int:
    # f32 -> 8 sublanes, bf16/f16 -> 16, int8/fp8 -> 32 (packed vreg layouts).
    return max(8, 32 // itemsize)


def _run_copy(x2d: jax.Array, rows: int, block_rows: int, nbytes: int) -> jax.Array:
    grid = (pl.cdiv(rows, block_rows),)
    return pl.pallas_call(
        _copy_kernel,
        out_shape=jax.ShapeDtypeStruct((rows, _LANES), x2d.dtype),
        grid=grid,
        in_specs=[pl.BlockSpec((block_rows, _LANES), lambda i: (i, 0))],
        out_specs=pl.BlockSpec((block_rows, _LANES), lambda i: (i, 0)),
        compiler_params=pltpu.CompilerParams(
            dimension_semantics=("parallel",),
            vmem_limit_bytes=_VMEM_LIMIT_BYTES,
        ),
        cost_estimate=pl.CostEstimate(
            flops=0, transcendentals=0, bytes_accessed=2 * nbytes
        ),
    )(x2d)


def identity_copy(x: jax.Array, *, force_kernel: bool = False) -> jax.Array:
    """Materialize a fresh copy of x via a Pallas HBM->VMEM->HBM streaming copy.

    Prefer `identity_map` (no copy) unless a distinct buffer is genuinely
    required. Tiny inputs skip the kernel unless `force_kernel=True`.
    """
    orig_shape, dtype = x.shape, x.dtype
    n = int(x.size)
    if n == 0:
        return x
    itemsize = x.dtype.itemsize
    nbytes = n * itemsize

    if not force_kernel and nbytes < _SMALL_BYTES:
        # Fastest identity is no kernel; fixed pallas_call overhead exceeds
        # the entire copy time for tiny tensors on all TPU generations.
        return x

    sub = _sublane_multiple(itemsize)
    target_rows = max(sub, _TARGET_TILE_BYTES // (_LANES * itemsize))

    if n % _LANES == 0:
        # Fast path: no padding, no post-slice -> exactly 1 read + 1 write.
        rows = n // _LANES
        x2d = x.reshape(rows, _LANES)
        if rows <= target_rows:
            block_rows = rows  # single block; full-extent dims are always legal
        else:
            block_rows = (target_rows // sub) * sub  # sublane-aligned tile
        out2d = _run_copy(x2d, rows, block_rows, nbytes)
        return out2d.reshape(orig_shape)

    # Ragged path (n not a multiple of 128) — uncommon for projector tensors.
    # TODO(synk): a masked in-kernel tail store would avoid this pad/slice pass.
    flat = x.reshape(-1)
    rows = pl.cdiv(n, _LANES)
    block_rows = min(rows, target_rows)
    block_rows = -(-block_rows // sub) * sub
    rows_padded = -(-rows // block_rows) * block_rows
    padded_n = rows_padded * _LANES
    flat = jnp.pad(flat, (0, padded_n - n))
    x2d = flat.reshape(rows_padded, _LANES)
    out2d = _run_copy(x2d, rows_padded, block_rows, nbytes)
    return out2d.reshape(-1)[:n].reshape(orig_shape)


if __name__ == "__main__":
    key = jax.random.PRNGKey(0)
    # Small shapes consistent with a projector input: batch=2, seq=8, hidden=32.
    x = jax.random.normal(key, (2, 8, 32), dtype=jnp.float32)

    # Faithful forward path: zero-cost identity.
    y = identity_map(x)
    jax.block_until_ready(y)
    assert y.shape == x.shape and y.dtype == x.dtype
    assert bool(jnp.array_equal(y, x))

    # Pallas streaming-copy fast path (n multiple of 128; no pad, no slice).
    y2 = identity_copy(x, force_kernel=True)
    jax.block_until_ready(y2)
    assert y2.shape == x.shape and y2.dtype == x.dtype
    assert bool(jnp.array_equal(y2, x))

    # bf16 input exercises dtype-aware sublane rounding on the fast path.
    xb = jax.random.normal(key, (4, 8, 128), dtype=jnp.bfloat16)
    yb = identity_copy(xb, force_kernel=True)
    jax.block_until_ready(yb)
    assert yb.shape == xb.shape and yb.dtype == xb.dtype
    assert bool(jnp.array_equal(yb, xb))

    # Ragged size (105 elements) exercises the fallback path.
    xr = jax.random.normal(key, (3, 7, 5), dtype=jnp.float32)
    yr = identity_copy(xr, force_kernel=True)
    jax.block_until_ready(yr)
    assert yr.shape == xr.shape and yr.dtype == xr.dtype
    assert bool(jnp.array_equal(yr, xr))

    print("KERNEL_OK")
</pallas_src>

<mosaic_0001>
module attributes {stable_mosaic.version = 11 : i64} {
  func.func @_copy_kernel(%arg0: i32, %arg1: memref<4x128xf32, #tpu.memory_space<vmem>>, %arg2: memref<4x128xf32, #tpu.memory_space<vmem>>) attributes {dimension_semantics = [#tpu.dimension_semantics<parallel>], iteration_bounds = array<i64: 1>, scalar_prefetch = 0 : i64, scratch_operands = 0 : i64, tpu.core_type = #tpu.core_type<tc>, window_params = [{transform_indices = @transform_0, window_bounds = array<i64: 4, 128>}, {transform_indices = @transform_1, window_bounds = array<i64: 4, 128>}]} {
    %c0 = arith.constant 0 : index
    %c0_0 = arith.constant 0 : index
    %0 = vector.load %arg1[%c0, %c0_0] : memref<4x128xf32, #tpu.memory_space<vmem>>, vector<4x128xf32>
    %c0_1 = arith.constant 0 : index
    %c0_2 = arith.constant 0 : index
    %1 = vector.load %arg2[%c0_1, %c0_2] : memref<4x128xf32, #tpu.memory_space<vmem>>, vector<4x128xf32>
    tpu.vector_store %arg2[%c0_1, %c0_2], %0 {strides = array<i32>} : memref<4x128xf32, #tpu.memory_space<vmem>>, vector<4x128xf32>,
    return
  }
  func.func @transform_0(%arg0: i32) -> (i32, i32) {
    %c0_i32 = arith.constant 0 : i32
    %c0_i32_0 = arith.constant 0 : i32
    return %arg0, %c0_i32 : i32, i32
  }
  func.func @transform_1(%arg0: i32) -> (i32, i32) {
    %c0_i32 = arith.constant 0 : i32
    %c0_i32_0 = arith.constant 0 : i32
    return %arg0, %c0_i32 : i32, i32
  }
}

</mosaic_0001>

<llo_original>
// kernel: tpu_custom_call.1
$region0: #{tpu_custom_call.1}
  #allocation0 [shape = 'u32[]', space=smem, size = 0x4, offset = 0x4, fixed_abs, tag = 'smem constant byte address 0x4 - core index']
  #allocation1 [shape = 'u32[72,128]{1,0:T(1,128)}', space=vmem, size = 0x9000, scoped, tag = 'internal scratch']
  %s0 = inlined_call_operand.hbm [shape: f32[4,128], index: 0, kind: input, shape index: {}]
  %s1 = inlined_call_operand.hbm [shape: f32[4,128], index: 1, kind: output, shape index: {}]
  %s2 = sld [smem:[#allocation0]]
  $region18: #{tpu_custom_call.1} parent=0
    _
  %s4 = ssub.s32 1, %s2
  %s5 = scalar_select 0, %s4, %s2
  $region1: #{tpu_custom_call.1} parent=0
    #allocation2 [shape = 'u8[2048]{0}', space=vmem, size = 0x800, scoped, tag = 'input window, operand 0, single buffered']
    #allocation3 [shape = 's32[1]{0}', space=sflag, size = 0x4, scoped, tag = 'scoped memory for tpu_custom_call.1']
    #allocation4 [shape = 's32[1]{0}', space=sflag, size = 0x4, scoped, tag = 'scoped memory for tpu_custom_call.1']
    #allocation5 [shape = 'u8[2048]{0}', space=vmem, size = 0x800, scoped, tag = 'output window, operand 0, single buffered']
    %6 = vsyncpa [#allocation3], 0
    %7 = vsyncpa [#allocation4], 0
    // Predicated region
    $region2: #{tpu_custom_call.1} parent=1 // pred_check
      _
    $region3: #{tpu_custom_call.1} parent=1 // pred_check_branch
      %9 = sbr.rel (0) target = $region5
    $region4: #{tpu_custom_call.1} parent=1 // pred_region
      %11 = vsyncadd [#allocation3], 0
      %s13 = sshll.u32 %s0, 4
      %s14 = int_to_ptr.hbm [resolvable:$true] %s13
      %s15 = sshll.u32 [#allocation2], 4
      %s16 = int_to_ptr.vmem [resolvable:$true] %s15
      %18 = dma.hbm_to_vmem [thread:$0]  %s14, 64, %s16, [#allocation3]
    $region5: #{tpu_custom_call.1} parent=1 // pred_fallthru
      _
    // Predicated region
    $region6: #{tpu_custom_call.1} parent=1 // pred_check
      _
    $region7: #{tpu_custom_call.1} parent=1 // pred_check_branch
      %20 = sbr.rel (0) target = $region9
    $region8: #{tpu_custom_call.1} parent=1 // pred_region
      %22 = dma.done [#allocation3], 64
    $region9: #{tpu_custom_call.1} parent=1 // pred_fallthru
      _
    %v23 = vld [vmem:[#allocation2] sm:$0xf]
    %24 = vst [vmem:[#allocation5] sm:$0xf] %v23
    // Predicated region
    $region10: #{tpu_custom_call.1} parent=1 // pred_check
      _
    $region11: #{tpu_custom_call.1} parent=1 // pred_check_branch
      %26 = sbr.rel (0) target = $region13
    $region12: #{tpu_custom_call.1} parent=1 // pred_region
      %28 = vsyncadd [#allocation4], 0
      %s30 = sshll.u32 [#allocation5], 4
      %s31 = int_to_ptr.vmem [resolvable:$true] %s30
      %s32 = sshll.u32 %s1, 4
      %s33 = int_to_ptr.hbm [resolvable:$true] %s32
      %35 = dma.vmem_to_hbm [thread:$0]  %s31, 64, %s33, [#allocation4]
    $region13: #{tpu_custom_call.1} parent=1 // pred_fallthru
      _
    // Predicated region
    $region14: #{tpu_custom_call.1} parent=1 // pred_check
      _
    $region15: #{tpu_custom_call.1} parent=1 // pred_check_branch
      %37 = sbr.rel (0) target = $region17
    $region16: #{tpu_custom_call.1} parent=1 // pred_region
      %39 = dma.done [#allocation4], 64
    $region17: #{tpu_custom_call.1} parent=1 // pred_fallthru
      _
    %40 = vsyncpa [#allocation3], 1
    %41 = vsyncpa [#allocation4], 1

</llo_original>
